<compile_context>
chip_gen: v7x
topology: tpu7x:2x2x1
jax: 0.10.0
libtpu: 0.0.40
codegen_flags: <defaults>
</compile_context>

<pallas_src>
import jax
import jax.numpy as jnp
from jax.experimental import pallas as pl
from jax.experimental.pallas import tpu as pltpu


# ----------------------------------------------------------------------------
# Helpers
# ----------------------------------------------------------------------------
def _round_up(x, m):
    return ((x + m - 1) // m) * m


def _tpu_budget():
    """(usable VMEM bytes, #TensorCores) with safe fallbacks."""
    vmem_cap = 64 * 1024 * 1024
    cores = 1
    try:
        info = pltpu.get_tpu_info()
        vmem_cap = int(getattr(info, "vmem_capacity_bytes", vmem_cap))
        for attr in ("tensorcores_per_chip", "num_tensorcores", "num_cores",
                     "cores_per_chip"):
            v = getattr(info, attr, None)
            if isinstance(v, int) and v > 0:
                cores = v
                break
    except Exception:
        pass
    # Leave headroom for compiler-internal scratch / semaphores (critical on
    # v7x where physical VMEM per TensorCore is only 64 MiB).
    return int(vmem_cap * 0.85), cores


def _choose_tn(n, per_row_bytes, avail_bytes, *, max_tile=1024, prefer_split=False):
    """Row-tile size: multiple of 16, as large as VMEM allows (<= max_tile)."""
    n16 = _round_up(max(n, 1), 16)
    t = min(max_tile, n16)
    t = max(16, (t // 16) * 16)
    while t > 16 and t * per_row_bytes > avail_bytes:
        t -= 16
    # If one tile would cover all rows but there is enough work for two,
    # split so the 'parallel' row axis can shard across TensorCores (v7x).
    if prefer_split and t >= n16 and n16 >= 32:
        t = max(16, ((n16 // 2) // 16) * 16)
    return t


def _inner_tile(d, target=512):
    """Inner-hidden tile: prefer multiples of 256 (2x256^2 MXU), else 128, else full."""
    if d <= 128:
        return d
    for step in (256, 128):
        c = (min(target, d) // step) * step
        while c >= step:
            if d % c == 0:
                return c
            c -= step
    return d


# ----------------------------------------------------------------------------
# Kernels
# ----------------------------------------------------------------------------
def _ffn_resident_kernel(x_ref, w1_ref, b1_ref, w2_ref, b2_ref, o_ref):
    # Weights/biases are fully VMEM-resident (constant index maps); 1-D grid
    # over row tiles.  Cast the activation tile in-kernel (free VPU work,
    # avoids an extra HBM pass in the wrapper).
    x = x_ref[...].astype(w1_ref.dtype)
    h1 = jnp.dot(x, w1_ref[...], preferred_element_type=jnp.float32)
    h1 = jnp.maximum(h1 + b1_ref[...], 0.0)
    # TODO(synk): nn.Dropout is identity in eval mode; no PRNG mask applied here.
    h2 = jnp.dot(h1.astype(w2_ref.dtype), w2_ref[...],
                 preferred_element_type=jnp.float32)
    o_ref[...] = (h2 + b2_ref[...]).astype(o_ref.dtype)


def _ffn_streaming_kernel(x_ref, w1_ref, b1_ref, w2_ref, b2_ref, o_ref, acc_ref):
    # 2-D grid: rows (parallel) x inner-hidden tiles (arbitrary reduction).
    j = pl.program_id(1)

    x = x_ref[...].astype(w1_ref.dtype)
    h1 = jnp.dot(x, w1_ref[...], preferred_element_type=jnp.float32)
    h1 = jnp.maximum(h1 + b1_ref[...], 0.0)
    # TODO(synk): nn.Dropout is identity in eval mode; no PRNG mask applied here.
    partial = jnp.dot(h1.astype(w2_ref.dtype), w2_ref[...],
                      preferred_element_type=jnp.float32)

    @pl.when(j == 0)
    def _():
        acc_ref[...] = partial          # direct write: saves a zero store + reload

    @pl.when(j > 0)
    def _():
        acc_ref[...] += partial

    @pl.when(j == pl.num_programs(1) - 1)
    def _():
        o_ref[...] = (acc_ref[...] + b2_ref[...]).astype(o_ref.dtype)


# ----------------------------------------------------------------------------
# Wrapper
# ----------------------------------------------------------------------------
def prepare_ffn_params(w1, b1, w2, b2, compute_dtype=jnp.bfloat16):
    """Cast / reshape parameters ONCE (outside the per-call path)."""
    return (w1.astype(compute_dtype),
            b1.reshape(1, -1).astype(jnp.float32),
            w2.astype(compute_dtype),
            b2.reshape(1, -1).astype(jnp.float32))


def feed_forward_layer(h, params, *, out_dtype=None, allow_resident_weights=True,
                       max_row_block=1024, inner_block=512):
    """h [..., H] -> [..., H], matching PyTorch FeedForwardLayer.forward (eval)."""
    w1_c, b1_r, w2_c, b2_r = params
    orig_shape = h.shape
    H = orig_shape[-1]
    Dh = w1_c.shape[1]
    assert w1_c.shape == (H, Dh) and w2_c.shape == (Dh, H)
    out_dtype = out_dtype or h.dtype

    x = h.reshape(-1, H)
    N = x.shape[0]

    vmem_budget, n_cores = _tpu_budget()
    csize = jnp.dtype(w1_c.dtype).itemsize
    x_size = jnp.dtype(x.dtype).itemsize
    o_size = jnp.dtype(out_dtype).itemsize

    weight_bytes = 2 * (H * Dh + Dh * H) * csize     # conservative (double buffers)
    bias_bytes = 2 * (Dh + H) * 4
    resident = allow_resident_weights and (weight_bytes + bias_bytes) <= vmem_budget // 3

    if resident:
        # Per-row-tile VMEM: x + out double buffers, f32/bf16 intermediates.
        per_row = 2 * H * (x_size + o_size) + Dh * 6 + H * 6
        avail = max(vmem_budget - weight_bytes - bias_bytes, 0)
        tn = _choose_tn(N, per_row, avail, max_tile=max_row_block,
                        prefer_split=True)   # extra row tile is ~free when weights resident
    else:
        tdh = _inner_tile(Dh, target=inner_block)
        per_row = 2 * H * (x_size + o_size) + H * 4 + tdh * 6 + H * 4
        fixed = 2 * (H * tdh + tdh * H) * csize + bias_bytes
        avail = max(vmem_budget - fixed, 0)
        # Weight slices are re-streamed once per row tile: make tn as large as
        # VMEM allows; only split rows for megacore when we really have >1 TC.
        tn = _choose_tn(N, per_row, avail, max_tile=max_row_block,
                        prefer_split=(n_cores > 1))

    N_pad = _round_up(max(N, 1), tn)
    if N_pad != N:
        x = jnp.pad(x, ((0, N_pad - N), (0, 0)))

    if resident:
        out = pl.pallas_call(
            _ffn_resident_kernel,
            out_shape=jax.ShapeDtypeStruct((N_pad, H), out_dtype),
            grid_spec=pltpu.PrefetchScalarGridSpec(
                num_scalar_prefetch=0,
                grid=(N_pad // tn,),
                in_specs=[
                    pl.BlockSpec((tn, H), lambda i: (i, 0)),    # x rows
                    pl.BlockSpec((H, Dh), lambda i: (0, 0)),    # W1 resident
                    pl.BlockSpec((1, Dh), lambda i: (0, 0)),    # b1 resident
                    pl.BlockSpec((Dh, H), lambda i: (0, 0)),    # W2 resident
                    pl.BlockSpec((1, H), lambda i: (0, 0)),     # b2 resident
                ],
                out_specs=pl.BlockSpec((tn, H), lambda i: (i, 0)),
            ),
            compiler_params=pltpu.CompilerParams(
                dimension_semantics=("parallel",),
                vmem_limit_bytes=vmem_budget,
            ),
        )(x, w1_c, b1_r, w2_c, b2_r)
    else:
        out = pl.pallas_call(
            _ffn_streaming_kernel,
            out_shape=jax.ShapeDtypeStruct((N_pad, H), out_dtype),
            grid_spec=pltpu.PrefetchScalarGridSpec(
                num_scalar_prefetch=0,
                grid=(N_pad // tn, Dh // tdh),
                in_specs=[
                    pl.BlockSpec((tn, H), lambda i, j: (i, 0)),     # x rows
                    pl.BlockSpec((H, tdh), lambda i, j: (0, j)),    # W1 inner slice
                    pl.BlockSpec((1, tdh), lambda i, j: (0, j)),    # b1 slice
                    pl.BlockSpec((tdh, H), lambda i, j: (j, 0)),    # W2 inner slice
                    pl.BlockSpec((1, H), lambda i, j: (0, 0)),      # b2
                ],
                out_specs=pl.BlockSpec((tn, H), lambda i, j: (i, 0)),
                scratch_shapes=[pltpu.VMEM((tn, H), jnp.float32)],
            ),
            compiler_params=pltpu.CompilerParams(
                dimension_semantics=("parallel", "arbitrary"),
                vmem_limit_bytes=vmem_budget,
            ),
        )(x, w1_c, b1_r, w2_c, b2_r)

    if N_pad != N:
        out = out[:N]
    return out.reshape(orig_shape)


# ----------------------------------------------------------------------------
if __name__ == "__main__":
    def _ref(h, w1, b1, w2, b2):
        H = h.shape[-1]
        flat = h.reshape(-1, H)
        return (jnp.maximum(flat @ w1 + b1, 0.0) @ w2 + b2).reshape(h.shape)

    # Test 1: small shapes (batch=2, seq=8, hidden=32, inner=64) -> resident path.
    B, M, H, Dh = 2, 8, 32, 64
    key = jax.random.PRNGKey(0)
    k1, k2, k3, k4, k5, k6 = jax.random.split(key, 6)
    h = jax.random.normal(k1, (B, M, H), jnp.float32)
    w1 = (0.02 * jax.random.normal(k2, (H, Dh))).astype(jnp.float32)
    b1 = (0.02 * jax.random.normal(k3, (Dh,))).astype(jnp.float32)
    w2 = (0.02 * jax.random.normal(k4, (Dh, H))).astype(jnp.float32)
    b2 = (0.02 * jax.random.normal(k5, (H,))).astype(jnp.float32)

    params = prepare_ffn_params(w1, b1, w2, b2)   # cast weights once
    out = feed_forward_layer(h, params)
    jax.block_until_ready(out)
    err = float(jnp.max(jnp.abs(out - _ref(h, w1, b1, w2, b2))))
    assert out.shape == (B, M, H)
    assert err < 5e-2, f"resident path: max abs err {err}"

    # Test 2: exercise the streaming (inner-dim reduction) path as well, with
    # slightly larger (still small) shapes and the resident path disabled.
    B2, M2, H2, Dh2 = 2, 15, 128, 256   # N=30 is ragged -> exercises row padding
    h2 = jax.random.normal(k6, (B2, M2, H2), jnp.float32)
    kk = jax.random.split(jax.random.PRNGKey(1), 4)
    w1b = (0.02 * jax.random.normal(kk[0], (H2, Dh2))).astype(jnp.float32)
    b1b = (0.02 * jax.random.normal(kk[1], (Dh2,))).astype(jnp.float32)
    w2b = (0.02 * jax.random.normal(kk[2], (Dh2, H2))).astype(jnp.float32)
    b2b = (0.02 * jax.random.normal(kk[3], (H2,))).astype(jnp.float32)

    params2 = prepare_ffn_params(w1b, b1b, w2b, b2b)
    out2 = feed_forward_layer(h2, params2, allow_resident_weights=False,
                              inner_block=128)    # forces Dh tiling (2 reduction steps)
    jax.block_until_ready(out2)
    err2 = float(jnp.max(jnp.abs(out2 - _ref(h2, w1b, b1b, w2b, b2b))))
    assert out2.shape == (B2, M2, H2)
    assert err2 < 5e-2, f"streaming path: max abs err {err2}"

    print("KERNEL_OK")
</pallas_src>

<mosaic_0001>
module attributes {stable_mosaic.version = 11 : i64} {
  func.func @_ffn_resident_kernel(%arg0: i32, %arg1: memref<16x32xf32, #tpu.memory_space<vmem>>, %arg2: memref<32x64xbf16, #tpu.memory_space<vmem>>, %arg3: memref<1x64xf32, #tpu.memory_space<vmem>>, %arg4: memref<64x32xbf16, #tpu.memory_space<vmem>>, %arg5: memref<1x32xf32, #tpu.memory_space<vmem>>, %arg6: memref<16x32xf32, #tpu.memory_space<vmem>>) attributes {dimension_semantics = [#tpu.dimension_semantics<parallel>], iteration_bounds = array<i64: 1>, scalar_prefetch = 0 : i64, scratch_operands = 0 : i64, tpu.core_type = #tpu.core_type<tc>, window_params = [{transform_indices = @transform_0, window_bounds = array<i64: 16, 32>}, {pipeline_mode = #tpu.pipeline_mode<synchronous>, transform_indices = @transform_1, window_bounds = array<i64: 32, 64>}, {pipeline_mode = #tpu.pipeline_mode<synchronous>, transform_indices = @transform_2, window_bounds = array<i64: 1, 64>}, {pipeline_mode = #tpu.pipeline_mode<synchronous>, transform_indices = @transform_3, window_bounds = array<i64: 64, 32>}, {pipeline_mode = #tpu.pipeline_mode<synchronous>, transform_indices = @transform_4, window_bounds = array<i64: 1, 32>}, {transform_indices = @transform_5, window_bounds = array<i64: 16, 32>}]} {
    %c0 = arith.constant 0 : index
    %c0_0 = arith.constant 0 : index
    %0 = vector.load %arg1[%c0, %c0_0] : memref<16x32xf32, #tpu.memory_space<vmem>>, vector<16x32xf32>
    %1 = arith.truncf %0 : vector<16x32xf32> to vector<16x32xbf16>
    %c0_1 = arith.constant 0 : index
    %c0_2 = arith.constant 0 : index
    %2 = vector.load %arg2[%c0_1, %c0_2] : memref<32x64xbf16, #tpu.memory_space<vmem>>, vector<32x64xbf16>
    %cst = arith.constant dense<0.000000e+00> : vector<16x64xf32>
    %3 = tpu.matmul %1, %2, %cst {dimension_numbers = #tpu.dot_dimension_numbers<[1], [0], [0], [1], [0, 0, 1, 1], [], []>} : vector<16x32xbf16>, vector<32x64xbf16>, vector<16x64xf32> -> vector<16x64xf32>
    %c0_3 = arith.constant 0 : index
    %c0_4 = arith.constant 0 : index
    %4 = vector.load %arg3[%c0_3, %c0_4] : memref<1x64xf32, #tpu.memory_space<vmem>>, vector<1x64xf32>
    %5 = vector.broadcast %4 : vector<1x64xf32> to vector<16x64xf32>
    %6 = arith.addf %3, %5 : vector<16x64xf32>
    %cst_5 = arith.constant 0.000000e+00 : f32
    %7 = vector.broadcast %cst_5 : f32 to vector<16x64xf32>
    %8 = arith.maximumf %6, %7 : vector<16x64xf32>
    %9 = arith.truncf %8 : vector<16x64xf32> to vector<16x64xbf16>
    %c0_6 = arith.constant 0 : index
    %c0_7 = arith.constant 0 : index
    %10 = vector.load %arg4[%c0_6, %c0_7] : memref<64x32xbf16, #tpu.memory_space<vmem>>, vector<64x32xbf16>
    %cst_8 = arith.constant dense<0.000000e+00> : vector<16x32xf32>
    %11 = tpu.matmul %9, %10, %cst_8 {dimension_numbers = #tpu.dot_dimension_numbers<[1], [0], [0], [1], [0, 0, 1, 1], [], []>} : vector<16x64xbf16>, vector<64x32xbf16>, vector<16x32xf32> -> vector<16x32xf32>
    %c0_9 = arith.constant 0 : index
    %c0_10 = arith.constant 0 : index
    %12 = vector.load %arg5[%c0_9, %c0_10] : memref<1x32xf32, #tpu.memory_space<vmem>>, vector<1x32xf32>
    %13 = vector.broadcast %12 : vector<1x32xf32> to vector<16x32xf32>
    %14 = arith.addf %11, %13 : vector<16x32xf32>
    %c0_11 = arith.constant 0 : index
    %c0_12 = arith.constant 0 : index
    %15 = vector.load %arg6[%c0_11, %c0_12] : memref<16x32xf32, #tpu.memory_space<vmem>>, vector<16x32xf32>
    tpu.vector_store %arg6[%c0_11, %c0_12], %14 {strides = array<i32>} : memref<16x32xf32, #tpu.memory_space<vmem>>, vector<16x32xf32>,
    return
  }
  func.func @transform_0(%arg0: i32) -> (i32, i32) {
    %c0_i32 = arith.constant 0 : i32
    %c0_i32_0 = arith.constant 0 : i32
    return %arg0, %c0_i32 : i32, i32
  }
  func.func @transform_1(%arg0: i32) -> (i32, i32) {
    %c0_i32 = arith.constant 0 : i32
    %c0_i32_0 = arith.constant 0 : i32
    %c0_i32_1 = arith.constant 0 : i32
    return %c0_i32, %c0_i32_0 : i32, i32
  }
  func.func @transform_2(%arg0: i32) -> (i32, i32) {
    %c0_i32 = arith.constant 0 : i32
    %c0_i32_0 = arith.constant 0 : i32
    %c0_i32_1 = arith.constant 0 : i32
    return %c0_i32, %c0_i32_0 : i32, i32
  }
  func.func @transform_3(%arg0: i32) -> (i32, i32) {
    %c0_i32 = arith.constant 0 : i32
    %c0_i32_0 = arith.constant 0 : i32
    %c0_i32_1 = arith.constant 0 : i32
    return %c0_i32, %c0_i32_0 : i32, i32
  }
  func.func @transform_4(%arg0: i32) -> (i32, i32) {
    %c0_i32 = arith.constant 0 : i32
    %c0_i32_0 = arith.constant 0 : i32
    %c0_i32_1 = arith.constant 0 : i32
    return %c0_i32, %c0_i32_0 : i32, i32
  }
  func.func @transform_5(%arg0: i32) -> (i32, i32) {
    %c0_i32 = arith.constant 0 : i32
    %c0_i32_0 = arith.constant 0 : i32
    return %arg0, %c0_i32 : i32, i32
  }
}

</mosaic_0001>

<llo_original>
// kernel: tpu_custom_call.1
$region0: #{tpu_custom_call.1}
  #allocation0 [shape = 'u32[]', space=smem, size = 0x4, offset = 0x4, fixed_abs, tag = 'smem constant byte address 0x4 - core index']
  #allocation1 [shape = 'u32[144,128]{1,0:T(1,128)}', space=vmem, size = 0x12000, scoped, tag = 'internal scratch']
  %s0 = inlined_call_operand.vmem [shape: f32[16,32], index: 0, kind: input, shape index: {}]
  %s1 = inlined_call_operand.vmem [shape: bf16[32,64], index: 1, kind: input, shape index: {}]
  %s2 = inlined_call_operand.vmem [shape: f32[1,64], index: 2, kind: input, shape index: {}]
  %s3 = inlined_call_operand.vmem [shape: bf16[64,32], index: 3, kind: input, shape index: {}]
  %s4 = inlined_call_operand.vmem [shape: f32[1,32], index: 4, kind: input, shape index: {}]
  %s5 = inlined_call_operand.hbm [shape: f32[16,32], index: 5, kind: output, shape index: {}]
  %s6 = sld [smem:[#allocation0]]
  $region30: #{tpu_custom_call.1} parent=0
    _
  %s8 = ssub.s32 1, %s6
  %s9 = scalar_select 0, %s8, %s6
  $region1: #{tpu_custom_call.1} parent=0
    #allocation2 [shape = 'u8[8192]{0}', space=vmem, size = 0x2000, scoped, tag = 'output window, operand 0, single buffered']
    #allocation3 [shape = 's32[1]{0}', space=sflag, size = 0x4, scoped, tag = 'scoped memory for tpu_custom_call.1']
    %10 = vsyncpa [#allocation3], 0
    // Predicated region
    $region2: #{tpu_custom_call.1} parent=1 // pred_check
      _
    $region3: #{tpu_custom_call.1} parent=1 // pred_check_branch
      %12 = sbr.rel (0) target = $region5
    $region4: #{tpu_custom_call.1} parent=1 // pred_region
      _
    $region5: #{tpu_custom_call.1} parent=1 // pred_fallthru
      _
    // Predicated region
    $region6: #{tpu_custom_call.1} parent=1 // pred_check
      _
    $region7: #{tpu_custom_call.1} parent=1 // pred_check_branch
      %14 = sbr.rel (0) target = $region9
    $region8: #{tpu_custom_call.1} parent=1 // pred_region
      _
    $region9: #{tpu_custom_call.1} parent=1 // pred_fallthru
      _
    // Predicated region
    $region10: #{tpu_custom_call.1} parent=1 // pred_check
      _
    $region11: #{tpu_custom_call.1} parent=1 // pred_check_branch
      %16 = sbr.rel (0) target = $region13
    $region12: #{tpu_custom_call.1} parent=1 // pred_region
      _
    $region13: #{tpu_custom_call.1} parent=1 // pred_fallthru
      _
    // Predicated region
    $region14: #{tpu_custom_call.1} parent=1 // pred_check
      _
    $region15: #{tpu_custom_call.1} parent=1 // pred_check_branch
      %18 = sbr.rel (0) target = $region17
    $region16: #{tpu_custom_call.1} parent=1 // pred_region
      _
    $region17: #{tpu_custom_call.1} parent=1 // pred_fallthru
      _
    // Predicated region
    $region18: #{tpu_custom_call.1} parent=1 // pred_check
      _
    $region19: #{tpu_custom_call.1} parent=1 // pred_check_branch
      %20 = sbr.rel (0) target = $region21
    $region20: #{tpu_custom_call.1} parent=1 // pred_region
      _
    $region21: #{tpu_custom_call.1} parent=1 // pred_fallthru
      _
    %v22 = vld [vmem:[%s0] sm:$0xff]
    %v23 = vld [vmem:[%s0 + $0x8] sm:$0xff]
    %v24 = vpack.c.bf16 %v23, %v22
    %v25 = vld [vmem:[%s1] sm:$0xf]
    %v26 = vld [vmem:[%s1 + $0x4] sm:$0xf]
    %v27 = vld [vmem:[%s1 + $0x8] sm:$0xf]
    %v28 = vld [vmem:[%s1 + $0xc] sm:$0xf]
    %v29 = vld [vmem:[%s2] sm:$0x1]
    %v31 = vlaneseq
    %v32 = vshrl.u32 %v31, 7
    %v33 = vsub.s32 0, %v32
    %v34 = vrot.slane %v29, %v33
    %v40 = vunpack.c.l.b16 %v25
    %v41 = vunpack.c.l.b16 %v26
    %v42 = vunpack.c.l.b16 %v27
    %v43 = vunpack.c.l.b16 %v28
    %v44 = vpack.c.b16 %v41, %v40
    %v45 = vpack.c.b16 %v43, %v42
    %vm48 = vcmask 261120
    %v50 = vsel %vm48, %v24, 0
    %52 = vmatprep.subr.bf16.mxu0 0
    %53 = vmatpush1.bf16.msra.mxu0 %v44
    %54 = vmatprep.subr.bf16.mxu0 0
    %55 = vmatpush1.bf16.msra.mxu0 %v45
    %56 = vmatprep.subr.bf16.mxu0 0
    %57 = vmatpush1.bf16.msra.mxu0 0
    %58 = vmatprep.subr.bf16.mxu0 0
    %59 = vmatpush1.bf16.msra.mxu0 0
    %60 = vmatprep.subr.bf16.mxu0 0
    %61 = vmatpush1.bf16.msra.mxu0 0
    %62 = vmatprep.subr.bf16.mxu0 0
    %63 = vmatpush1.bf16.msra.mxu0 0
    %64 = vmatprep.subr.bf16.mxu0 0
    %65 = vmatpush1.bf16.msra.mxu0 0
    %66 = vmatprep.subr.bf16.mxu0 0
    %67 = vmatpush1.bf16.msra.mxu0 0
    %68 = vmatprep.subr.bf16.mxu0 0
    %69 = vmatpush1.bf16.msra.mxu0 0
    %70 = vmatprep.subr.bf16.mxu0 0
    %71 = vmatpush1.bf16.msra.mxu0 0
    %72 = vmatprep.subr.bf16.mxu0 0
    %73 = vmatpush1.bf16.msra.mxu0 0
    %74 = vmatprep.subr.bf16.mxu0 0
    %75 = vmatpush1.bf16.msra.mxu0 0
    %76 = vmatprep.subr.bf16.mxu0 0
    %77 = vmatpush1.bf16.msra.mxu0 0
    %78 = vmatprep.subr.bf16.mxu0 0
    %79 = vmatpush1.bf16.msra.mxu0 0
    %80 = vmatprep.subr.bf16.mxu0 0
    %81 = vmatpush1.bf16.msra.mxu0 0
    %82 = vmatprep.subr.bf16.mxu0 0
    %83 = vmatpush1.bf16.msra.mxu0 0
    %84 = vmatprep.mubr.bf16.mxu0 0
    %85 = vmatmul.mubr.bf16.gmra.mrb[0].mxu0 %v50
    %v86 = vpop.f32.mrb[0].mxu0
    %v87 = vadd.f32 %v34, %v86
    %v88 = vpop.f32.mrb[0].mxu0
    %v89 = vpop.f32.mrb[0].mxu0
    %v90 = vadd.f32 %v34, %v89
    %v91 = vpop.f32.mrb[0].mxu0
    %92 = vdwg.mxu0
    %v93 = vmax.f32 %v87, 0.0
    %v94 = vmax.f32 %v90, 0.0
    %v95 = vpack.c.bf16 %v94, %v93
    %v96 = vld [vmem:[%s3] sm:$0xf]
    %v97 = vld [vmem:[%s3 + $0x4] sm:$0xf]
    %v98 = vld [vmem:[%s3 + $0x8] sm:$0xf]
    %v99 = vld [vmem:[%s3 + $0xc] sm:$0xf]
    %v100 = vld [vmem:[%s3 + $0x10] sm:$0xf]
    %v101 = vld [vmem:[%s3 + $0x14] sm:$0xf]
    %v102 = vld [vmem:[%s3 + $0x18] sm:$0xf]
    %v103 = vld [vmem:[%s3 + $0x1c] sm:$0xf]
    %v104 = vld [vmem:[%s4] sm:$0x1]
    %v106 = vlaneseq
    %v107 = vshrl.u32 %v106, 7
    %v108 = vsub.s32 0, %v107
    %v109 = vrot.slane %v104, %v108
    %v119 = vunpack.c.l.b16 %v96
    %v120 = vunpack.c.l.b16 %v97
    %v121 = vunpack.c.l.b16 %v98
    %v122 = vunpack.c.l.b16 %v99
    %v123 = vunpack.c.l.b16 %v100
    %v124 = vunpack.c.l.b16 %v101
    %v125 = vunpack.c.l.b16 %v102
    %v126 = vunpack.c.l.b16 %v103
    %v127 = vpack.c.b16 %v120, %v119
    %v128 = vpack.c.b16 %v122, %v121
    %v129 = vpack.c.b16 %v124, %v123
    %v130 = vpack.c.b16 %v126, %v125
    %vm135 = vcmask 523264
    %v137 = vsel %vm135, %v95, 0
    %139 = vmatprep.subr.bf16.mxu0 0
    %140 = vmatpush1.bf16.msra.mxu0 %v127
    %141 = vmatprep.subr.bf16.mxu0 0
    %142 = vmatpush1.bf16.msra.mxu0 %v128
    %143 = vmatprep.subr.bf16.mxu0 0
    %144 = vmatpush1.bf16.msra.mxu0 %v129
    %145 = vmatprep.subr.bf16.mxu0 0
    %146 = vmatpush1.bf16.msra.mxu0 %v130
    %147 = vmatprep.subr.bf16.mxu0 0
    %148 = vmatpush1.bf16.msra.mxu0 0
    %149 = vmatprep.subr.bf16.mxu0 0
    %150 = vmatpush1.bf16.msra.mxu0 0
    %151 = vmatprep.subr.bf16.mxu0 0
    %152 = vmatpush1.bf16.msra.mxu0 0
    %153 = vmatprep.subr.bf16.mxu0 0
    %154 = vmatpush1.bf16.msra.mxu0 0
    %155 = vmatprep.subr.bf16.mxu0 0
    %156 = vmatpush1.bf16.msra.mxu0 0
    %157 = vmatprep.subr.bf16.mxu0 0
    %158 = vmatpush1.bf16.msra.mxu0 0
    %159 = vmatprep.subr.bf16.mxu0 0
    %160 = vmatpush1.bf16.msra.mxu0 0
    %161 = vmatprep.subr.bf16.mxu0 0
    %162 = vmatpush1.bf16.msra.mxu0 0
    %163 = vmatprep.subr.bf16.mxu0 0
    %164 = vmatpush1.bf16.msra.mxu0 0
    %165 = vmatprep.subr.bf16.mxu0 0
    %166 = vmatpush1.bf16.msra.mxu0 0
    %167 = vmatprep.subr.bf16.mxu0 0
    %168 = vmatpush1.bf16.msra.mxu0 0
    %169 = vmatprep.subr.bf16.mxu0 0
    %170 = vmatpush1.bf16.msra.mxu0 0
    %171 = vmatprep.mubr.bf16.mxu0 0
    %172 = vmatmul.mubr.bf16.gmra.mrb[0].mxu0 %v137
    %v173 = vpop.f32.mrb[0].mxu0
    %v174 = vadd.f32 %v109, %v173
    %v175 = vpop.f32.mrb[0].mxu0
    %v176 = vpop.f32.mrb[0].mxu0
    %v177 = vadd.f32 %v109, %v176
    %v178 = vpop.f32.mrb[0].mxu0
    %179 = vdwg.mxu0
    %180 = vst.msk [vmem:[#allocation2] sm:$0xff] %vm48, %v174
    %181 = vst.msk [vmem:[#allocation2 + $0x8] sm:$0xff] %vm48, %v177
    // Predicated region
    $region22: #{tpu_custom_call.1} parent=1 // pred_check
      _
    $region23: #{tpu_custom_call.1} parent=1 // pred_check_branch
      %183 = sbr.rel (0) target = $region25
    $region24: #{tpu_custom_call.1} parent=1 // pred_region
      %s185 = ssub.s32 256, 256
      %186 = vsyncadd [#allocation3], %s185
      %s187 = sshll.u32 [#allocation2], 4
      %s188 = int_to_ptr.vmem [resolvable:$true] %s187
      %193 = dma.vmem_to_hbm [thread:$0]  %s188, 256, %s5, [#allocation3], 128, 128, 8
    $region25: #{tpu_custom_call.1} parent=1 // pred_fallthru
      _
    // Predicated region
    $region26: #{tpu_custom_call.1} parent=1 // pred_check
      _
    $region27: #{tpu_custom_call.1} parent=1 // pred_check_branch
      %195 = sbr.rel (0) target = $region29
    $region28: #{tpu_custom_call.1} parent=1 // pred_region
      %196 = dma.done [#allocation3], 256
    $region29: #{tpu_custom_call.1} parent=1 // pred_fallthru
      _
    %197 = vsyncpa [#allocation3], 1

</llo_original>
